<compile_context>
chip_gen: v5e
topology: v5e:2x2
jax: 0.10.0
libtpu: 0.0.40
codegen_flags: <defaults>
</compile_context>

<pallas_src>
import functools

import jax
import jax.numpy as jnp
from jax.experimental import pallas as pl
from jax.experimental.pallas import tpu as pltpu


def tail_linear_kernel(x_ref, w_ref, o_ref, acc_ref):
    """o[i, 0] = sum_d x[i, d] * w[0, d]; f32 accumulation across K tiles."""
    k = pl.program_id(1)

    @pl.when(k == 0)
    def _():
        acc_ref[...] = jnp.zeros_like(acc_ref)

    prod = x_ref[...].astype(jnp.float32) * w_ref[...].astype(jnp.float32)
    acc_ref[...] += jnp.sum(prod, axis=-1, keepdims=True)

    @pl.when(k == pl.num_programs(1) - 1)
    def _():
        o_ref[...] = acc_ref[...].astype(o_ref.dtype)


@functools.lru_cache(maxsize=1)
def _chip_config():
    """Per-generation VMEM budgets (conservative v7x-sized defaults on failure)."""
    try:
        vmem_bytes = int(pltpu.get_tpu_info().vmem_capacity_bytes)
    except Exception:
        try:
            kind = jax.devices()[0].device_kind.lower()
            vmem_bytes = (64 << 20) if "7" in kind else (128 << 20)
        except Exception:
            vmem_bytes = 64 << 20  # assume the smallest (v7x) VMEM
    if vmem_bytes <= (64 << 20):
        # v7x: 3 x 8 MiB x-buffers + tiny weight/out buffers < 32 MiB scoped.
        return {"x_buf_bytes": 8 << 20, "vmem_limit": 32 << 20,
                "x_buffers": 3, "ensure_multi_tile": True}
    # v5e / v6e: 128 MiB physical VMEM, one TensorCore per chip.
    return {"x_buf_bytes": 16 << 20, "vmem_limit": 64 << 20,
            "x_buffers": 2, "ensure_multi_tile": False}


def _pick_tiles(n, d, itemsize, x_buf_bytes, ensure_multi_tile):
    """(tile_n, tile_d): x block sized from the byte budget, (8,128)-legal."""
    row_bytes = max(1, d * itemsize)
    if 8 * row_bytes > x_buf_bytes:
        # Very large D: even 8 rows blow the budget -> K-tile the feature dim.
        tile_d = max(128, ((x_buf_bytes // (8 * itemsize)) // 128) * 128)
        return (n if n <= 8 else 8), min(tile_d, d)
    tile_n = x_buf_bytes // row_bytes          # purely budget-derived (no row cap)
    if tile_n >= n:
        if ensure_multi_tile and n > 8:
            # v7x: force >= 2 row tiles so both TensorCores get work.
            half = (((n + 1) // 2) + 7) // 8 * 8
            if half < n:
                return half, d
        return n, d
    return max(8, (tile_n // 8) * 8), d


def _make_x_spec(block_shape, index_map, n_buffers):
    if n_buffers != 2:
        try:
            # Deeper x pipeline (v7x): keep the fast HBM DMA engine saturated.
            return pl.BlockSpec(block_shape, index_map,
                                pipeline_mode=pl.Buffered(n_buffers))
        except Exception:
            pass  # older jax without pipeline_mode: fall back to 2-deep default
    return pl.BlockSpec(block_shape, index_map)


def discriminator_forward(x, params, *, use_pallas=None, _force_tiles=None):
    """Forward pass of Discriminator (n_layers=1: empty body, then tail)."""
    w = params["tail_w"]                       # (1, D) -- lane-dense row
    n, d = x.shape
    assert w.shape == (1, d)

    if use_pallas is None:
        # Below ~16 MiB of activations the custom-call boundary + grid warm-up
        # dwarfs the few us of HBM time and blocks XLA fusion with neighbors.
        use_pallas = n * d * x.dtype.itemsize >= (16 << 20)
    if not use_pallas:
        return x @ w.T

    cfg = _chip_config()
    if _force_tiles is not None:
        tile_n, tile_d = _force_tiles
    else:
        tile_n, tile_d = _pick_tiles(n, d, x.dtype.itemsize,
                                     cfg["x_buf_bytes"], cfg["ensure_multi_tile"])

    # K-tiling edge case (huge D): zero-pad features so tile_d divides D and
    # the padded columns contribute exactly zero to the reduction.
    if tile_d < d:
        pad = (-d) % tile_d
        if pad:
            x = jnp.pad(x, ((0, 0), (0, pad)))
            w = jnp.pad(w, ((0, 0), (0, pad)))
        d_pad = d + pad
    else:
        d_pad = d
    k_tiles = d_pad // tile_d

    grid = (pl.cdiv(n, tile_n), k_tiles)

    return pl.pallas_call(
        tail_linear_kernel,
        out_shape=jax.ShapeDtypeStruct((n, 1), x.dtype),
        grid_spec=pltpu.PrefetchScalarGridSpec(
            num_scalar_prefetch=0,
            grid=grid,
            in_specs=[
                # x: streamed (tile_n, tile_d) tiles, multi-buffered by Pallas.
                _make_x_spec((tile_n, tile_d), lambda i, k: (i, k),
                             cfg["x_buffers"]),
                # weight: lane-dense row, resident across the row-tile axis.
                pl.BlockSpec((1, tile_d), lambda i, k: (0, k)),
            ],
            out_specs=pl.BlockSpec((tile_n, 1), lambda i, k: (i, 0)),
            scratch_shapes=[pltpu.VMEM((tile_n, 1), jnp.float32)],
        ),
        compiler_params=pltpu.CompilerParams(
            # Row tiles are independent -> parallel (v7x: both TensorCores);
            # K axis reduces into the VMEM accumulator -> arbitrary.
            dimension_semantics=("parallel", "arbitrary"),
            vmem_limit_bytes=cfg["vmem_limit"],
        ),
    )(x, w)


def init_discriminator_params(key, in_planes=1536, n_layers=1, hidden=None):
    """Mirrors Discriminator.__init__ shapes deterministically.

    For n_layers=1 (the module default) the body is empty and _hidden ==
    in_planes, so the only parameter is tail = Linear(in_planes, 1, bias=False)
    with xavier_normal_ init: std = sqrt(2 / (fan_in + fan_out)).  The weight
    is stored as (1, in_planes), matching torch.nn.Linear's weight shape.
    """
    _hidden = in_planes if hidden is None else hidden
    # TODO(synk): body blocks (Linear + BatchNorm1d + LeakyReLU) for n_layers > 1.
    assert n_layers == 1, "only the default n_layers=1 configuration is implemented"
    std = (2.0 / (_hidden + 1)) ** 0.5
    tail_w = std * jax.random.normal(key, (1, _hidden), dtype=jnp.float32)
    return {"tail_w": tail_w}


if __name__ == "__main__":
    key = jax.random.PRNGKey(0)
    k_param, k_x = jax.random.split(key)

    # Small shapes consistent with the module: batch=8, in_planes=256.
    batch, in_planes = 8, 256
    params = init_discriminator_params(k_param, in_planes=in_planes, n_layers=1)
    x = jax.random.normal(k_x, (batch, in_planes), dtype=jnp.float32)

    # Plain-JAX reference of the same forward pass.
    ref = x @ params["tail_w"].T

    # 1) Force the Pallas path so the kernel is exercised at demo size.
    out = jax.block_until_ready(discriminator_forward(x, params, use_pallas=True))
    assert out.shape == (batch, 1)
    assert jnp.allclose(out, ref, atol=1e-4, rtol=1e-4)

    # 2) Exercise the general multi-row-tile + K-tiled accumulation path with
    #    small forced tiles (validates the (parallel, arbitrary) grid logic).
    x2 = jax.random.normal(jax.random.PRNGKey(1), (32, in_planes), dtype=jnp.float32)
    ref2 = x2 @ params["tail_w"].T
    out2 = jax.block_until_ready(
        discriminator_forward(x2, params, use_pallas=True, _force_tiles=(8, 128)))
    assert out2.shape == (32, 1)
    assert jnp.allclose(out2, ref2, atol=1e-4, rtol=1e-4)

    # 3) Default dispatch at this tiny size takes the XLA-fused bypass path.
    out_small = jax.block_until_ready(discriminator_forward(x, params))
    assert jnp.allclose(out_small, ref, atol=1e-4, rtol=1e-4)

    print("KERNEL_OK")
</pallas_src>

<mosaic_0001>
module attributes {stable_mosaic.version = 11 : i64} {
  func.func @tail_linear_kernel(%arg0: i32, %arg1: i32, %arg2: memref<8x256xf32, #tpu.memory_space<vmem>>, %arg3: memref<1x256xf32, #tpu.memory_space<vmem>>, %arg4: memref<8x1xf32, #tpu.memory_space<vmem>>, %arg5: memref<8x1xf32, #tpu.memory_space<vmem>>) attributes {dimension_semantics = [#tpu.dimension_semantics<parallel>, #tpu.dimension_semantics<arbitrary>], iteration_bounds = array<i64: 1, 1>, scalar_prefetch = 0 : i64, scratch_operands = 1 : i64, tpu.core_type = #tpu.core_type<tc>, window_params = [{transform_indices = @transform_0, window_bounds = array<i64: 8, 256>}, {transform_indices = @transform_1, window_bounds = array<i64: 1, 256>}, {transform_indices = @transform_2, window_bounds = array<i64: 8, 1>}]} {
    %c0_i32 = arith.constant 0 : i32
    %0 = arith.cmpi eq, %arg1, %c0_i32 : i32
    %1 = arith.extui %0 : i1 to i32
    %c0_i32_0 = arith.constant 0 : i32
    %2 = arith.cmpi ne, %1, %c0_i32_0 : i32
    scf.if %2 {
      %cst_10 = arith.constant 0.000000e+00 : f32
      %15 = vector.broadcast %cst_10 : f32 to vector<8x1xf32>
      %c0_11 = arith.constant 0 : index
      %c0_12 = arith.constant 0 : index
      %16 = vector.load %arg5[%c0_11, %c0_12] : memref<8x1xf32, #tpu.memory_space<vmem>>, vector<8x1xf32>
      tpu.vector_store %arg5[%c0_11, %c0_12], %15 {strides = array<i32>} : memref<8x1xf32, #tpu.memory_space<vmem>>, vector<8x1xf32>,
    } else {
    }
    %c0 = arith.constant 0 : index
    %c0_1 = arith.constant 0 : index
    %3 = vector.load %arg2[%c0, %c0_1] : memref<8x256xf32, #tpu.memory_space<vmem>>, vector<8x256xf32>
    %c0_2 = arith.constant 0 : index
    %c0_3 = arith.constant 0 : index
    %4 = vector.load %arg3[%c0_2, %c0_3] : memref<1x256xf32, #tpu.memory_space<vmem>>, vector<1x256xf32>
    %5 = vector.broadcast %4 : vector<1x256xf32> to vector<8x256xf32>
    %6 = arith.mulf %3, %5 : vector<8x256xf32>
    %c0_4 = arith.constant 0 : index
    %c0_5 = arith.constant 0 : index
    %7 = vector.load %arg5[%c0_4, %c0_5] : memref<8x1xf32, #tpu.memory_space<vmem>>, vector<8x1xf32>
    %cst = arith.constant dense<0.000000e+00> : vector<8xf32>
    %8 = vector.multi_reduction <add>, %6, %cst [1] : vector<8x256xf32> to vector<8xf32>
    %9 = vector.shape_cast %8 : vector<8xf32> to vector<8x1xf32>
    %10 = arith.addf %7, %9 : vector<8x1xf32>
    %c0_6 = arith.constant 0 : index
    %c0_7 = arith.constant 0 : index
    %11 = vector.load %arg5[%c0_6, %c0_7] : memref<8x1xf32, #tpu.memory_space<vmem>>, vector<8x1xf32>
    tpu.vector_store %arg5[%c0_6, %c0_7], %10 {strides = array<i32>} : memref<8x1xf32, #tpu.memory_space<vmem>>, vector<8x1xf32>,
    %c0_i32_8 = arith.constant 0 : i32
    %12 = arith.cmpi eq, %arg1, %c0_i32_8 : i32
    %13 = arith.extui %12 : i1 to i32
    %c0_i32_9 = arith.constant 0 : i32
    %14 = arith.cmpi ne, %13, %c0_i32_9 : i32
    scf.if %14 {
      %c0_10 = arith.constant 0 : index
      %c0_11 = arith.constant 0 : index
      %15 = vector.load %arg5[%c0_10, %c0_11] : memref<8x1xf32, #tpu.memory_space<vmem>>, vector<8x1xf32>
      %c0_12 = arith.constant 0 : index
      %c0_13 = arith.constant 0 : index
      %16 = vector.load %arg4[%c0_12, %c0_13] : memref<8x1xf32, #tpu.memory_space<vmem>>, vector<8x1xf32>
      tpu.vector_store %arg4[%c0_12, %c0_13], %15 {strides = array<i32>} : memref<8x1xf32, #tpu.memory_space<vmem>>, vector<8x1xf32>,
    } else {
    }
    return
  }
  func.func @transform_0(%arg0: i32, %arg1: i32) -> (i32, i32) {
    %c0_i32 = arith.constant 0 : i32
    return %arg0, %arg1 : i32, i32
  }
  func.func @transform_1(%arg0: i32, %arg1: i32) -> (i32, i32) {
    %c0_i32 = arith.constant 0 : i32
    %c0_i32_0 = arith.constant 0 : i32
    return %c0_i32, %arg1 : i32, i32
  }
  func.func @transform_2(%arg0: i32, %arg1: i32) -> (i32, i32) {
    %c0_i32 = arith.constant 0 : i32
    %c0_i32_0 = arith.constant 0 : i32
    return %arg0, %c0_i32 : i32, i32
  }
}

</mosaic_0001>

<llo_original>
// kernel: tpu_custom_call.1
$region0: #{tpu_custom_call.1}
  #allocation0 [shape = 'u32[]', space=smem, size = 0x4, offset = 0x4, fixed_abs, tag = 'smem constant byte address 0x4 - core index']
  #allocation1 [shape = 'u32[72,128]{1,0:T(1,128)}', space=vmem, size = 0x9000, scoped, tag = 'internal scratch']
  #allocation2 [shape = 'f32[8,1]{1,0:T(8,128)}', space=vmem, size = 0x1000, scoped, tag = 'scratch operand']
  %s0 = inlined_call_operand.hbm [shape: f32[8,256], index: 0, kind: input, shape index: {}]
  %s1 = inlined_call_operand.hbm [shape: f32[1,256], index: 1, kind: input, shape index: {}]
  %s2 = inlined_call_operand.vmem [shape: f32[8,1], index: 2, kind: output, shape index: {}]
  %s3 = sld [smem:[#allocation0]]
  $region34: #{tpu_custom_call.1} parent=0
    _
  %s5 = ssub.s32 1, %s3
  %s6 = scalar_select 0, %s5, %s3
  $region1: #{tpu_custom_call.1} parent=0
    #allocation3 [shape = 'u8[8192]{0}', space=vmem, size = 0x2000, scoped, tag = 'input window, operand 0, single buffered']
    #allocation4 [shape = 's32[1]{0}', space=sflag, size = 0x4, scoped, tag = 'scoped memory for tpu_custom_call.1']
    #allocation5 [shape = 'u8[1024]{0}', space=vmem, size = 0x400, scoped, tag = 'input window, operand 1, single buffered']
    #allocation6 [shape = 's32[1]{0}', space=sflag, size = 0x4, scoped, tag = 'scoped memory for tpu_custom_call.1']
    %7 = vsyncpa [#allocation4], 0
    %8 = vsyncpa [#allocation6], 0
    // Predicated region
    $region2: #{tpu_custom_call.1} parent=1 // pred_check
      _
    $region3: #{tpu_custom_call.1} parent=1 // pred_check_branch
      %10 = sbr.rel (0) target = $region5
    $region4: #{tpu_custom_call.1} parent=1 // pred_region
      %12 = vsyncadd [#allocation4], 0
      %s14 = sshll.u32 %s0, 4
      %s15 = int_to_ptr.hbm [resolvable:$true] %s14
      %s16 = sshll.u32 [#allocation3], 4
      %s17 = int_to_ptr.vmem [resolvable:$true] %s16
      %19 = dma.hbm_to_vmem [thread:$0]  %s15, 256, %s17, [#allocation4]
    $region5: #{tpu_custom_call.1} parent=1 // pred_fallthru
      _
    // Predicated region
    $region6: #{tpu_custom_call.1} parent=1 // pred_check
      _
    $region7: #{tpu_custom_call.1} parent=1 // pred_check_branch
      %21 = sbr.rel (0) target = $region9
    $region8: #{tpu_custom_call.1} parent=1 // pred_region
      %23 = vsyncadd [#allocation6], 0
      %s25 = sshll.u32 %s1, 4
      %s26 = int_to_ptr.hbm [resolvable:$true] %s25
      %s27 = sshll.u32 [#allocation5], 4
      %s28 = int_to_ptr.vmem [resolvable:$true] %s27
      %30 = dma.hbm_to_vmem [thread:$0]  %s26, 32, %s28, [#allocation6]
    $region9: #{tpu_custom_call.1} parent=1 // pred_fallthru
      _
    // Predicated region
    $region10: #{tpu_custom_call.1} parent=1 // pred_check
      _
    $region11: #{tpu_custom_call.1} parent=1 // pred_check_branch
      %32 = sbr.rel (0) target = $region13
    $region12: #{tpu_custom_call.1} parent=1 // pred_region
      %34 = dma.done [#allocation4], 256
    $region13: #{tpu_custom_call.1} parent=1 // pred_fallthru
      _
    // Predicated region
    $region14: #{tpu_custom_call.1} parent=1 // pred_check
      _
    $region15: #{tpu_custom_call.1} parent=1 // pred_check_branch
      %36 = sbr.rel (0) target = $region17
    $region16: #{tpu_custom_call.1} parent=1 // pred_region
      %38 = dma.done [#allocation6], 32
    $region17: #{tpu_custom_call.1} parent=1 // pred_fallthru
      _
    %p39 = scmp.eq.s32.totalorder 0, 0
    // Predicated region
    $region18: #{tpu_custom_call.1} parent=1 // pred_check
      %p40 = pneg %p39
    $region19: #{tpu_custom_call.1} parent=1 // pred_check_branch
      %42 = sbr.rel (%p40) target = $region21
    $region20: #{tpu_custom_call.1} parent=1 // pred_region
      %vm43 = vcmask 7168
      %44 = vst.msk [vmem:[#allocation2] sm:$0xff] %vm43, 0.0
    $region21: #{tpu_custom_call.1} parent=1 // pred_fallthru
      _
    %v45 = vld [vmem:[#allocation3] sm:$0xff]
    %v46 = vld [vmem:[#allocation3 + $0x8] sm:$0xff]
    %v47 = vld [vmem:[#allocation5] sm:$0x3]
    %v49 = vperm.slane %v47, 0
    %v50 = vperm.slane %v47, 1
    %v53 = vmul.f32 %v45, %v49
    %v54 = vmul.f32 %v46, %v50
    %v55 = vld [vmem:[#allocation2] sm:$0xff]
    %v56 = vadd.f32 %v53, %v54
    %57 = vadd.xlane.f32.xlu0 %v56
    %v58 = vpop.xlane.xlu0 %57
    %v59 = vadd.f32 %v55, %v58
    %vm60 = vcmask 7168
    %61 = vst.msk [vmem:[#allocation2] sm:$0xff] %vm60, %v59
    // Predicated region
    $region22: #{tpu_custom_call.1} parent=1 // pred_check
      %p62 = pneg %p39
    $region23: #{tpu_custom_call.1} parent=1 // pred_check_branch
      %64 = sbr.rel (%p62) target = $region25
    $region24: #{tpu_custom_call.1} parent=1 // pred_region
      %v65 = vld [vmem:[#allocation2] sm:$0xff]
      %66 = vst.msk [vmem:[%s2] sm:$0xff] %vm60, %v65
    $region25: #{tpu_custom_call.1} parent=1 // pred_fallthru
      _
    // Predicated region
    $region26: #{tpu_custom_call.1} parent=1 // pred_check
      _
    $region27: #{tpu_custom_call.1} parent=1 // pred_check_branch
      %68 = sbr.rel (0) target = $region29
    $region28: #{tpu_custom_call.1} parent=1 // pred_region
      _
    $region29: #{tpu_custom_call.1} parent=1 // pred_fallthru
      _
    // Predicated region
    $region30: #{tpu_custom_call.1} parent=1 // pred_check
      _
    $region31: #{tpu_custom_call.1} parent=1 // pred_check_branch
      %70 = sbr.rel (0) target = $region33
    $region32: #{tpu_custom_call.1} parent=1 // pred_region
      _
    $region33: #{tpu_custom_call.1} parent=1 // pred_fallthru
      _
    %71 = vsyncpa [#allocation4], 1
    %72 = vsyncpa [#allocation6], 1

</llo_original>
